<compile_context>
chip_gen: v7x
topology: tpu7x:2x2x1
jax: 0.10.0
libtpu: 0.0.40
codegen_flags: <defaults>
</compile_context>

<pallas_src>
import jax
import jax.numpy as jnp
from jax.experimental import pallas as pl
from jax.experimental.pallas import tpu as pltpu

IN_DIM = 2
HID_DIM = 7
EMB_DIM = 8
OUT_DIM = 7

# Packed-parameter layout: one (24, 16) f32 block, 8-sublane-aligned per layer.
#   rows  0:8  -> layer1: w1 at [0:7, 0:2],  b1 at [0:7, 2:3]
#   rows  8:16 -> layer2: w2 at [8:16, 0:7], b2 at [8:16, 7:8]
#   rows 16:24 -> layer3: w3 at [16:23, 0:8], b3 at [16:23, 8:9]
P_ROWS = 24
P_COLS = 16


def _round_up(x, m):
    return ((x + m - 1) // m) * m


def _vpu_linear(w, b, x):
    """y = W @ x + b as K lane-parallel broadcast-FMAs on the VPU.

    w: (N, K) PyTorch-layout weight, b: (N, 1), x: (K, TILE_B) feature-major.
    K, N are tiny (2/7/8); each term is a (N,1)*(1,TILE_B) broadcast multiply
    over the 128-lane batch axis.  No MXU involvement.
    """
    n, k_dim = w.shape
    tb = x.shape[1]
    acc = jnp.broadcast_to(b, (n, tb))          # bias hoisted once per tile
    for k in range(k_dim):                      # static unroll, K <= 8
        acc = acc + w[:, k:k + 1] * x[k:k + 1, :]
    return acc


def classifier_kernel(x_ref, p_ref, emb_ref, out_ref):
    """One batch tile: 3 tiny linear layers + 2 ReLUs, feature-major, VPU-only."""
    x = x_ref[...]                               # (2, TILE_B) feature-major
    p = p_ref[...]                               # (24, 16) packed params

    w1, b1 = p[0:7, 0:2], p[0:7, 2:3]
    w2, b2 = p[8:16, 0:7], p[8:16, 7:8]
    w3, b3 = p[16:23, 0:8], p[16:23, 8:9]

    h1 = jnp.maximum(_vpu_linear(w1, b1, x), 0.0)     # (7, TILE_B)
    emb = jnp.maximum(_vpu_linear(w2, b2, h1), 0.0)   # (8, TILE_B)
    out = _vpu_linear(w3, b3, emb)                    # (7, TILE_B)

    # Two lane-dense feature-major outputs (no pad rows, unmasked stores).
    emb_ref[...] = emb.astype(emb_ref.dtype)
    out_ref[...] = out.astype(out_ref.dtype)


def _pack_params(params):
    w1, b1, w2, b2, w3, b3 = params
    p = jnp.zeros((P_ROWS, P_COLS), jnp.float32)
    p = p.at[0:7, 0:2].set(w1).at[0:7, 2:3].set(jnp.reshape(b1, (HID_DIM, 1)))
    p = p.at[8:16, 0:7].set(w2).at[8:16, 7:8].set(jnp.reshape(b2, (EMB_DIM, 1)))
    p = p.at[16:23, 0:8].set(w3).at[16:23, 8:9].set(jnp.reshape(b3, (OUT_DIM, 1)))
    return p


def _pick_tile_b(batch, requested):
    """Lane-dense tile (multiple of 128).  Big enough to amortize the ~0.35 us
    per-grid-step overhead, small enough to keep double-buffered VMEM modest
    on v7x (64 MiB), and split so large batches get >=2 grid steps (megacore)."""
    requested = min(max(int(requested), 128), 65536)
    requested = _round_up(requested, 128)
    t = min(requested, _round_up(batch, 128))
    half = _round_up(-(-batch // 2), 128)
    if half >= 4096:                 # only split when each half still amortizes overhead
        t = min(t, half)
    return t


def classifier_forward(x, params, tile_b=32768, feature_major_output=False,
                       out_dtype=jnp.float32):
    """x: [B, 2] float32.

    Returns (embedding, output):
      * feature_major_output=False (default): (B, 8), (B, 7)  -- PyTorch layout.
      * feature_major_output=True:            (8, B), (7, B)  -- kernel-native
        layout; skips the extra HBM transpose pass (bandwidth-optimal).
    """
    w_packed = _pack_params(params)
    B = x.shape[0]

    tb = _pick_tile_b(B, tile_b)
    b_pad = _round_up(B, tb)
    grid = (b_pad // tb,)

    # Feature-major activations; pad batch to a whole number of tiles.
    # (Transpose + pad fuse into one small XLA copy: ~8 B/elem of ~68 B/elem.)
    xt = jnp.transpose(x)                        # (2, B)
    if b_pad != B:
        xt = jnp.pad(xt, ((0, 0), (0, b_pad - B)))

    emb_fm, out_fm = pl.pallas_call(
        classifier_kernel,
        grid=grid,
        in_specs=[
            pl.BlockSpec((IN_DIM, tb), lambda i: (0, i)),       # x tile (2, tb)
            pl.BlockSpec((P_ROWS, P_COLS), lambda i: (0, 0)),   # packed params, VMEM-resident
        ],
        out_specs=(
            pl.BlockSpec((EMB_DIM, tb), lambda i: (0, i)),      # emb (8, tb)
            pl.BlockSpec((OUT_DIM, tb), lambda i: (0, i)),      # out (7, tb)
        ),
        out_shape=(
            jax.ShapeDtypeStruct((EMB_DIM, b_pad), out_dtype),
            jax.ShapeDtypeStruct((OUT_DIM, b_pad), out_dtype),
        ),
        compiler_params=pltpu.CompilerParams(
            dimension_semantics=("parallel",),
            vmem_limit_bytes=32 * 1024 * 1024,
        ),
    )(xt, w_packed)

    if feature_major_output:
        return emb_fm[:, :B], out_fm[:, :B]
    # PyTorch-compatible batch-major results (one fused slice+transpose copy).
    return emb_fm[:, :B].T, out_fm[:, :B].T


def init_params(key):
    """PyTorch-style init.  Linear(in, out): weight (out, in), bias (out, 1)."""
    def linear_init(k, fan_in, fan_out):
        kw, kb = jax.random.split(k)
        bound = 1.0 / jnp.sqrt(fan_in)
        w = jax.random.uniform(kw, (fan_out, fan_in), jnp.float32, -bound, bound)
        b = jax.random.uniform(kb, (fan_out, 1), jnp.float32, -bound, bound)
        return w, b

    k1, k2, k3 = jax.random.split(key, 3)
    w1, b1 = linear_init(k1, IN_DIM, HID_DIM)
    w2, b2 = linear_init(k2, HID_DIM, EMB_DIM)
    w3, b3 = linear_init(k3, EMB_DIM, OUT_DIM)
    return (w1, b1, w2, b2, w3, b3)


def reference_forward(x, params):
    w1, b1, w2, b2, w3, b3 = params
    h1 = jnp.maximum(x @ w1.T + b1.T, 0.0)
    emb = jnp.maximum(h1 @ w2.T + b2.T, 0.0)
    out = emb @ w3.T + b3.T
    return emb, out


if __name__ == "__main__":
    key = jax.random.PRNGKey(0)
    k_x, k_p, k_x2 = jax.random.split(key, 3)
    params = init_params(k_p)

    # --- Main check: small batch, default (PyTorch-layout) outputs ----------
    B = 8  # kernel pads to one 128-lane tile
    x = jax.random.normal(k_x, (B, IN_DIM), dtype=jnp.float32)
    emb, out = classifier_forward(x, params)
    jax.block_until_ready((emb, out))

    emb_ref, out_ref = reference_forward(x, params)
    assert emb.shape == (B, EMB_DIM) and out.shape == (B, OUT_DIM)
    assert jnp.allclose(emb, emb_ref, atol=1e-5, rtol=1e-5)
    assert jnp.allclose(out, out_ref, atol=1e-5, rtol=1e-5)

    # --- Second check: multi-tile grid, ragged batch, feature-major fast path
    B2 = 1000
    x2 = jax.random.normal(k_x2, (B2, IN_DIM), dtype=jnp.float32)
    emb2_fm, out2_fm = classifier_forward(x2, params, tile_b=256,
                                          feature_major_output=True)
    jax.block_until_ready((emb2_fm, out2_fm))

    emb2_ref, out2_ref = reference_forward(x2, params)
    assert emb2_fm.shape == (EMB_DIM, B2) and out2_fm.shape == (OUT_DIM, B2)
    assert jnp.allclose(emb2_fm.T, emb2_ref, atol=1e-5, rtol=1e-5)
    assert jnp.allclose(out2_fm.T, out2_ref, atol=1e-5, rtol=1e-5)

    print("KERNEL_OK")
</pallas_src>

<mosaic_0001>
module attributes {stable_mosaic.version = 11 : i64} {
  func.func @classifier_kernel(%arg0: i32, %arg1: memref<2x128xf32, #tpu.memory_space<vmem>>, %arg2: memref<24x16xf32, #tpu.memory_space<vmem>>, %arg3: memref<8x128xf32, #tpu.memory_space<vmem>>, %arg4: memref<7x128xf32, #tpu.memory_space<vmem>>) attributes {dimension_semantics = [#tpu.dimension_semantics<parallel>], iteration_bounds = array<i64: 1>, scalar_prefetch = 0 : i64, scratch_operands = 0 : i64, tpu.core_type = #tpu.core_type<tc>, window_params = [{transform_indices = @transform_0, window_bounds = array<i64: 2, 128>}, {pipeline_mode = #tpu.pipeline_mode<synchronous>, transform_indices = @transform_1, window_bounds = array<i64: 24, 16>}, {transform_indices = @transform_2, window_bounds = array<i64: 8, 128>}, {transform_indices = @transform_3, window_bounds = array<i64: 7, 128>}]} {
    %c0 = arith.constant 0 : index
    %c0_0 = arith.constant 0 : index
    %0 = vector.load %arg1[%c0, %c0_0] : memref<2x128xf32, #tpu.memory_space<vmem>>, vector<2x128xf32>
    %c0_1 = arith.constant 0 : index
    %c0_2 = arith.constant 0 : index
    %1 = vector.load %arg2[%c0_1, %c0_2] : memref<24x16xf32, #tpu.memory_space<vmem>>, vector<24x16xf32>
    %2 = vector.extract_strided_slice %1 {offsets = [0, 0], sizes = [7, 2], strides = [1, 1]} : vector<24x16xf32> to vector<7x2xf32>
    %3 = vector.extract_strided_slice %1 {offsets = [0, 2], sizes = [7, 1], strides = [1, 1]} : vector<24x16xf32> to vector<7x1xf32>
    %4 = vector.extract_strided_slice %1 {offsets = [8, 0], sizes = [8, 7], strides = [1, 1]} : vector<24x16xf32> to vector<8x7xf32>
    %5 = vector.extract_strided_slice %1 {offsets = [8, 7], sizes = [8, 1], strides = [1, 1]} : vector<24x16xf32> to vector<8x1xf32>
    %6 = vector.extract_strided_slice %1 {offsets = [16, 0], sizes = [7, 8], strides = [1, 1]} : vector<24x16xf32> to vector<7x8xf32>
    %7 = vector.extract_strided_slice %1 {offsets = [16, 8], sizes = [7, 1], strides = [1, 1]} : vector<24x16xf32> to vector<7x1xf32>
    %8 = vector.shape_cast %3 : vector<7x1xf32> to vector<7x1xf32>
    %9 = vector.broadcast %8 : vector<7x1xf32> to vector<7x128xf32>
    %10 = vector.extract_strided_slice %2 {offsets = [0, 0], sizes = [7, 1], strides = [1, 1]} : vector<7x2xf32> to vector<7x1xf32>
    %11 = vector.extract_strided_slice %0 {offsets = [0, 0], sizes = [1, 128], strides = [1, 1]} : vector<2x128xf32> to vector<1x128xf32>
    %12 = vector.broadcast %10 : vector<7x1xf32> to vector<7x128xf32>
    %13 = vector.broadcast %11 : vector<1x128xf32> to vector<7x128xf32>
    %14 = arith.mulf %12, %13 : vector<7x128xf32>
    %15 = arith.addf %9, %14 : vector<7x128xf32>
    %16 = vector.extract_strided_slice %2 {offsets = [0, 1], sizes = [7, 1], strides = [1, 1]} : vector<7x2xf32> to vector<7x1xf32>
    %17 = vector.extract_strided_slice %0 {offsets = [1, 0], sizes = [1, 128], strides = [1, 1]} : vector<2x128xf32> to vector<1x128xf32>
    %18 = vector.broadcast %16 : vector<7x1xf32> to vector<7x128xf32>
    %19 = vector.broadcast %17 : vector<1x128xf32> to vector<7x128xf32>
    %20 = arith.mulf %18, %19 : vector<7x128xf32>
    %21 = arith.addf %15, %20 : vector<7x128xf32>
    %cst = arith.constant 0.000000e+00 : f32
    %22 = vector.broadcast %cst : f32 to vector<7x128xf32>
    %23 = arith.maximumf %21, %22 : vector<7x128xf32>
    %24 = vector.shape_cast %5 : vector<8x1xf32> to vector<8x1xf32>
    %25 = vector.broadcast %24 : vector<8x1xf32> to vector<8x128xf32>
    %26 = vector.extract_strided_slice %4 {offsets = [0, 0], sizes = [8, 1], strides = [1, 1]} : vector<8x7xf32> to vector<8x1xf32>
    %27 = vector.extract_strided_slice %23 {offsets = [0, 0], sizes = [1, 128], strides = [1, 1]} : vector<7x128xf32> to vector<1x128xf32>
    %28 = vector.broadcast %26 : vector<8x1xf32> to vector<8x128xf32>
    %29 = vector.broadcast %27 : vector<1x128xf32> to vector<8x128xf32>
    %30 = arith.mulf %28, %29 : vector<8x128xf32>
    %31 = arith.addf %25, %30 : vector<8x128xf32>
    %32 = vector.extract_strided_slice %4 {offsets = [0, 1], sizes = [8, 1], strides = [1, 1]} : vector<8x7xf32> to vector<8x1xf32>
    %33 = vector.extract_strided_slice %23 {offsets = [1, 0], sizes = [1, 128], strides = [1, 1]} : vector<7x128xf32> to vector<1x128xf32>
    %34 = vector.broadcast %32 : vector<8x1xf32> to vector<8x128xf32>
    %35 = vector.broadcast %33 : vector<1x128xf32> to vector<8x128xf32>
    %36 = arith.mulf %34, %35 : vector<8x128xf32>
    %37 = arith.addf %31, %36 : vector<8x128xf32>
    %38 = vector.extract_strided_slice %4 {offsets = [0, 2], sizes = [8, 1], strides = [1, 1]} : vector<8x7xf32> to vector<8x1xf32>
    %39 = vector.extract_strided_slice %23 {offsets = [2, 0], sizes = [1, 128], strides = [1, 1]} : vector<7x128xf32> to vector<1x128xf32>
    %40 = vector.broadcast %38 : vector<8x1xf32> to vector<8x128xf32>
    %41 = vector.broadcast %39 : vector<1x128xf32> to vector<8x128xf32>
    %42 = arith.mulf %40, %41 : vector<8x128xf32>
    %43 = arith.addf %37, %42 : vector<8x128xf32>
    %44 = vector.extract_strided_slice %4 {offsets = [0, 3], sizes = [8, 1], strides = [1, 1]} : vector<8x7xf32> to vector<8x1xf32>
    %45 = vector.extract_strided_slice %23 {offsets = [3, 0], sizes = [1, 128], strides = [1, 1]} : vector<7x128xf32> to vector<1x128xf32>
    %46 = vector.broadcast %44 : vector<8x1xf32> to vector<8x128xf32>
    %47 = vector.broadcast %45 : vector<1x128xf32> to vector<8x128xf32>
    %48 = arith.mulf %46, %47 : vector<8x128xf32>
    %49 = arith.addf %43, %48 : vector<8x128xf32>
    %50 = vector.extract_strided_slice %4 {offsets = [0, 4], sizes = [8, 1], strides = [1, 1]} : vector<8x7xf32> to vector<8x1xf32>
    %51 = vector.extract_strided_slice %23 {offsets = [4, 0], sizes = [1, 128], strides = [1, 1]} : vector<7x128xf32> to vector<1x128xf32>
    %52 = vector.broadcast %50 : vector<8x1xf32> to vector<8x128xf32>
    %53 = vector.broadcast %51 : vector<1x128xf32> to vector<8x128xf32>
    %54 = arith.mulf %52, %53 : vector<8x128xf32>
    %55 = arith.addf %49, %54 : vector<8x128xf32>
    %56 = vector.extract_strided_slice %4 {offsets = [0, 5], sizes = [8, 1], strides = [1, 1]} : vector<8x7xf32> to vector<8x1xf32>
    %57 = vector.extract_strided_slice %23 {offsets = [5, 0], sizes = [1, 128], strides = [1, 1]} : vector<7x128xf32> to vector<1x128xf32>
    %58 = vector.broadcast %56 : vector<8x1xf32> to vector<8x128xf32>
    %59 = vector.broadcast %57 : vector<1x128xf32> to vector<8x128xf32>
    %60 = arith.mulf %58, %59 : vector<8x128xf32>
    %61 = arith.addf %55, %60 : vector<8x128xf32>
    %62 = vector.extract_strided_slice %4 {offsets = [0, 6], sizes = [8, 1], strides = [1, 1]} : vector<8x7xf32> to vector<8x1xf32>
    %63 = vector.extract_strided_slice %23 {offsets = [6, 0], sizes = [1, 128], strides = [1, 1]} : vector<7x128xf32> to vector<1x128xf32>
    %64 = vector.broadcast %62 : vector<8x1xf32> to vector<8x128xf32>
    %65 = vector.broadcast %63 : vector<1x128xf32> to vector<8x128xf32>
    %66 = arith.mulf %64, %65 : vector<8x128xf32>
    %67 = arith.addf %61, %66 : vector<8x128xf32>
    %cst_3 = arith.constant 0.000000e+00 : f32
    %68 = vector.broadcast %cst_3 : f32 to vector<8x128xf32>
    %69 = arith.maximumf %67, %68 : vector<8x128xf32>
    %70 = vector.shape_cast %7 : vector<7x1xf32> to vector<7x1xf32>
    %71 = vector.broadcast %70 : vector<7x1xf32> to vector<7x128xf32>
    %72 = vector.extract_strided_slice %6 {offsets = [0, 0], sizes = [7, 1], strides = [1, 1]} : vector<7x8xf32> to vector<7x1xf32>
    %73 = vector.extract_strided_slice %69 {offsets = [0, 0], sizes = [1, 128], strides = [1, 1]} : vector<8x128xf32> to vector<1x128xf32>
    %74 = vector.broadcast %72 : vector<7x1xf32> to vector<7x128xf32>
    %75 = vector.broadcast %73 : vector<1x128xf32> to vector<7x128xf32>
    %76 = arith.mulf %74, %75 : vector<7x128xf32>
    %77 = arith.addf %71, %76 : vector<7x128xf32>
    %78 = vector.extract_strided_slice %6 {offsets = [0, 1], sizes = [7, 1], strides = [1, 1]} : vector<7x8xf32> to vector<7x1xf32>
    %79 = vector.extract_strided_slice %69 {offsets = [1, 0], sizes = [1, 128], strides = [1, 1]} : vector<8x128xf32> to vector<1x128xf32>
    %80 = vector.broadcast %78 : vector<7x1xf32> to vector<7x128xf32>
    %81 = vector.broadcast %79 : vector<1x128xf32> to vector<7x128xf32>
    %82 = arith.mulf %80, %81 : vector<7x128xf32>
    %83 = arith.addf %77, %82 : vector<7x128xf32>
    %84 = vector.extract_strided_slice %6 {offsets = [0, 2], sizes = [7, 1], strides = [1, 1]} : vector<7x8xf32> to vector<7x1xf32>
    %85 = vector.extract_strided_slice %69 {offsets = [2, 0], sizes = [1, 128], strides = [1, 1]} : vector<8x128xf32> to vector<1x128xf32>
    %86 = vector.broadcast %84 : vector<7x1xf32> to vector<7x128xf32>
    %87 = vector.broadcast %85 : vector<1x128xf32> to vector<7x128xf32>
    %88 = arith.mulf %86, %87 : vector<7x128xf32>
    %89 = arith.addf %83, %88 : vector<7x128xf32>
    %90 = vector.extract_strided_slice %6 {offsets = [0, 3], sizes = [7, 1], strides = [1, 1]} : vector<7x8xf32> to vector<7x1xf32>
    %91 = vector.extract_strided_slice %69 {offsets = [3, 0], sizes = [1, 128], strides = [1, 1]} : vector<8x128xf32> to vector<1x128xf32>
    %92 = vector.broadcast %90 : vector<7x1xf32> to vector<7x128xf32>
    %93 = vector.broadcast %91 : vector<1x128xf32> to vector<7x128xf32>
    %94 = arith.mulf %92, %93 : vector<7x128xf32>
    %95 = arith.addf %89, %94 : vector<7x128xf32>
    %96 = vector.extract_strided_slice %6 {offsets = [0, 4], sizes = [7, 1], strides = [1, 1]} : vector<7x8xf32> to vector<7x1xf32>
    %97 = vector.extract_strided_slice %69 {offsets = [4, 0], sizes = [1, 128], strides = [1, 1]} : vector<8x128xf32> to vector<1x128xf32>
    %98 = vector.broadcast %96 : vector<7x1xf32> to vector<7x128xf32>
    %99 = vector.broadcast %97 : vector<1x128xf32> to vector<7x128xf32>
    %100 = arith.mulf %98, %99 : vector<7x128xf32>
    %101 = arith.addf %95, %100 : vector<7x128xf32>
    %102 = vector.extract_strided_slice %6 {offsets = [0, 5], sizes = [7, 1], strides = [1, 1]} : vector<7x8xf32> to vector<7x1xf32>
    %103 = vector.extract_strided_slice %69 {offsets = [5, 0], sizes = [1, 128], strides = [1, 1]} : vector<8x128xf32> to vector<1x128xf32>
    %104 = vector.broadcast %102 : vector<7x1xf32> to vector<7x128xf32>
    %105 = vector.broadcast %103 : vector<1x128xf32> to vector<7x128xf32>
    %106 = arith.mulf %104, %105 : vector<7x128xf32>
    %107 = arith.addf %101, %106 : vector<7x128xf32>
    %108 = vector.extract_strided_slice %6 {offsets = [0, 6], sizes = [7, 1], strides = [1, 1]} : vector<7x8xf32> to vector<7x1xf32>
    %109 = vector.extract_strided_slice %69 {offsets = [6, 0], sizes = [1, 128], strides = [1, 1]} : vector<8x128xf32> to vector<1x128xf32>
    %110 = vector.broadcast %108 : vector<7x1xf32> to vector<7x128xf32>
    %111 = vector.broadcast %109 : vector<1x128xf32> to vector<7x128xf32>
    %112 = arith.mulf %110, %111 : vector<7x128xf32>
    %113 = arith.addf %107, %112 : vector<7x128xf32>
    %114 = vector.extract_strided_slice %6 {offsets = [0, 7], sizes = [7, 1], strides = [1, 1]} : vector<7x8xf32> to vector<7x1xf32>
    %115 = vector.extract_strided_slice %69 {offsets = [7, 0], sizes = [1, 128], strides = [1, 1]} : vector<8x128xf32> to vector<1x128xf32>
    %116 = vector.broadcast %114 : vector<7x1xf32> to vector<7x128xf32>
    %117 = vector.broadcast %115 : vector<1x128xf32> to vector<7x128xf32>
    %118 = arith.mulf %116, %117 : vector<7x128xf32>
    %119 = arith.addf %113, %118 : vector<7x128xf32>
    %c0_4 = arith.constant 0 : index
    %c0_5 = arith.constant 0 : index
    %120 = vector.load %arg3[%c0_4, %c0_5] : memref<8x128xf32, #tpu.memory_space<vmem>>, vector<8x128xf32>
    tpu.vector_store %arg3[%c0_4, %c0_5], %69 {strides = array<i32>} : memref<8x128xf32, #tpu.memory_space<vmem>>, vector<8x128xf32>,
    %c0_6 = arith.constant 0 : index
    %c0_7 = arith.constant 0 : index
    %121 = vector.load %arg4[%c0_6, %c0_7] : memref<7x128xf32, #tpu.memory_space<vmem>>, vector<7x128xf32>
    tpu.vector_store %arg4[%c0_6, %c0_7], %119 {strides = array<i32>} : memref<7x128xf32, #tpu.memory_space<vmem>>, vector<7x128xf32>,
    return
  }
  func.func @transform_0(%arg0: i32) -> (i32, i32) {
    %c0_i32 = arith.constant 0 : i32
    %c0_i32_0 = arith.constant 0 : i32
    return %c0_i32, %arg0 : i32, i32
  }
  func.func @transform_1(%arg0: i32) -> (i32, i32) {
    %c0_i32 = arith.constant 0 : i32
    %c0_i32_0 = arith.constant 0 : i32
    %c0_i32_1 = arith.constant 0 : i32
    return %c0_i32, %c0_i32_0 : i32, i32
  }
  func.func @transform_2(%arg0: i32) -> (i32, i32) {
    %c0_i32 = arith.constant 0 : i32
    %c0_i32_0 = arith.constant 0 : i32
    return %c0_i32, %arg0 : i32, i32
  }
  func.func @transform_3(%arg0: i32) -> (i32, i32) {
    %c0_i32 = arith.constant 0 : i32
    %c0_i32_0 = arith.constant 0 : i32
    return %c0_i32, %arg0 : i32, i32
  }
}

</mosaic_0001>

<llo_original>
// kernel: tpu_custom_call.1
$region0: #{tpu_custom_call.1}
  #allocation0 [shape = 'u32[]', space=smem, size = 0x4, offset = 0x4, fixed_abs, tag = 'smem constant byte address 0x4 - core index']
  #allocation1 [shape = 'u32[144,128]{1,0:T(1,128)}', space=vmem, size = 0x12000, scoped, tag = 'internal scratch']
  %s0 = inlined_call_operand.vmem [shape: f32[2,128], index: 0, kind: input, shape index: {}]
  %s1 = inlined_call_operand.vmem [shape: f32[24,16], index: 1, kind: input, shape index: {}]
  %s2 = inlined_call_operand.hbm [shape: f32[8,128], index: 2, kind: output, shape index: {0}]
  %s3 = inlined_call_operand.hbm [shape: f32[7,128], index: 3, kind: output, shape index: {1}]
  %4 = xla_tuple %s2, %s3
  %s5 = sld [smem:[#allocation0]]
  $region26: #{tpu_custom_call.1} parent=0
    _
  %s7 = ssub.s32 1, %s5
  %s8 = scalar_select 0, %s7, %s5
  $region1: #{tpu_custom_call.1} parent=0
    #allocation2 [shape = 'u8[4096]{0}', space=vmem, size = 0x1000, scoped, tag = 'output window, operand 0, single buffered']
    #allocation3 [shape = 's32[1]{0}', space=sflag, size = 0x4, scoped, tag = 'scoped memory for tpu_custom_call.1']
    #allocation4 [shape = 'u8[4096]{0}', space=vmem, size = 0x1000, scoped, tag = 'output window, operand 1, single buffered']
    #allocation5 [shape = 's32[1]{0}', space=sflag, size = 0x4, scoped, tag = 'scoped memory for tpu_custom_call.1']
    %9 = vsyncpa [#allocation3], 0
    %10 = vsyncpa [#allocation5], 0
    // Predicated region
    $region2: #{tpu_custom_call.1} parent=1 // pred_check
      _
    $region3: #{tpu_custom_call.1} parent=1 // pred_check_branch
      %12 = sbr.rel (0) target = $region5
    $region4: #{tpu_custom_call.1} parent=1 // pred_region
      _
    $region5: #{tpu_custom_call.1} parent=1 // pred_fallthru
      _
    // Predicated region
    $region6: #{tpu_custom_call.1} parent=1 // pred_check
      _
    $region7: #{tpu_custom_call.1} parent=1 // pred_check_branch
      %14 = sbr.rel (0) target = $region9
    $region8: #{tpu_custom_call.1} parent=1 // pred_region
      _
    $region9: #{tpu_custom_call.1} parent=1 // pred_fallthru
      _
    %v15 = vld [vmem:[%s0] sm:$0x3]
    %v16 = vld [vmem:[%s1] sm:$0xff]
    %v17 = vld [vmem:[%s1 + $0x8] sm:$0xff]
    %v18 = vld [vmem:[%s1 + $0x10] sm:$0xff]
    %20 = vset.pattern.permute.xlu0 2
    %21 = vperm.xlu0 %20, %v16
    %v22 = vpop.permute.xlu0 %21
    %24 = vset.pattern.permute.xlu0 0
    %25 = vperm.xlu0 %24, %v16
    %v26 = vpop.permute.xlu0 %25
    %v28 = vlaneseq
    %v29 = vshrl.u32 %v28, 7
    %v30 = vsub.s32 0, %v29
    %v31 = vrot.slane %v15, %v30
    %v32 = vmul.f32 %v26, %v31
    %v33 = vadd.f32 %v22, %v32
    %34 = vset.pattern.permute.xlu0 1
    %35 = vperm.xlu0 %34, %v16
    %v36 = vpop.permute.xlu0 %35
    %v38 = vlaneseq
    %v39 = vshrl.u32 %v38, 7
    %v40 = vsub.s32 1, %v39
    %v41 = vrot.slane %v15, %v40
    %v42 = vmul.f32 %v36, %v41
    %v43 = vadd.f32 %v33, %v42
    %v44 = vmax.f32 %v43, 0.0
    %46 = vset.pattern.permute.xlu0 7
    %47 = vperm.xlu0 %46, %v17
    %v48 = vpop.permute.xlu0 %47
    %50 = vset.pattern.permute.xlu0 0
    %51 = vperm.xlu0 %50, %v17
    %v52 = vpop.permute.xlu0 %51
    %v54 = vlaneseq
    %v55 = vshrl.u32 %v54, 7
    %v56 = vsub.s32 0, %v55
    %v57 = vrot.slane %v44, %v56
    %v58 = vmul.f32 %v52, %v57
    %v59 = vadd.f32 %v48, %v58
    %60 = vset.pattern.permute.xlu0 1
    %61 = vperm.xlu0 %60, %v17
    %v62 = vpop.permute.xlu0 %61
    %v64 = vlaneseq
    %v65 = vshrl.u32 %v64, 7
    %v66 = vsub.s32 1, %v65
    %v67 = vrot.slane %v44, %v66
    %v68 = vmul.f32 %v62, %v67
    %v69 = vadd.f32 %v59, %v68
    %70 = vset.pattern.permute.xlu0 2
    %71 = vperm.xlu0 %70, %v17
    %v72 = vpop.permute.xlu0 %71
    %v74 = vlaneseq
    %v75 = vshrl.u32 %v74, 7
    %v76 = vsub.s32 2, %v75
    %v77 = vrot.slane %v44, %v76
    %v78 = vmul.f32 %v72, %v77
    %v79 = vadd.f32 %v69, %v78
    %80 = vset.pattern.permute.xlu0 3
    %81 = vperm.xlu0 %80, %v17
    %v82 = vpop.permute.xlu0 %81
    %v84 = vlaneseq
    %v85 = vshrl.u32 %v84, 7
    %v86 = vsub.s32 3, %v85
    %v87 = vrot.slane %v44, %v86
    %v88 = vmul.f32 %v82, %v87
    %v89 = vadd.f32 %v79, %v88
    %90 = vset.pattern.permute.xlu0 4
    %91 = vperm.xlu0 %90, %v17
    %v92 = vpop.permute.xlu0 %91
    %v94 = vlaneseq
    %v95 = vshrl.u32 %v94, 7
    %v96 = vsub.s32 4, %v95
    %v97 = vrot.slane %v44, %v96
    %v98 = vmul.f32 %v92, %v97
    %v99 = vadd.f32 %v89, %v98
    %100 = vset.pattern.permute.xlu0 5
    %101 = vperm.xlu0 %100, %v17
    %v102 = vpop.permute.xlu0 %101
    %v104 = vlaneseq
    %v105 = vshrl.u32 %v104, 7
    %v106 = vsub.s32 5, %v105
    %v107 = vrot.slane %v44, %v106
    %v108 = vmul.f32 %v102, %v107
    %v109 = vadd.f32 %v99, %v108
    %110 = vset.pattern.permute.xlu0 6
    %111 = vperm.xlu0 %110, %v17
    %v112 = vpop.permute.xlu0 %111
    %v114 = vlaneseq
    %v115 = vshrl.u32 %v114, 7
    %v116 = vsub.s32 6, %v115
    %v117 = vrot.slane %v44, %v116
    %v118 = vmul.f32 %v112, %v117
    %v119 = vadd.f32 %v109, %v118
    %v120 = vmax.f32 %v119, 0.0
    %122 = vset.pattern.permute.xlu0 8
    %123 = vperm.xlu0 %122, %v18
    %v124 = vpop.permute.xlu0 %123
    %126 = vset.pattern.permute.xlu0 0
    %127 = vperm.xlu0 %126, %v18
    %v128 = vpop.permute.xlu0 %127
    %v130 = vlaneseq
    %v131 = vshrl.u32 %v130, 7
    %v132 = vsub.s32 0, %v131
    %v133 = vrot.slane %v120, %v132
    %v134 = vmul.f32 %v128, %v133
    %v135 = vadd.f32 %v124, %v134
    %136 = vset.pattern.permute.xlu0 1
    %137 = vperm.xlu0 %136, %v18
    %v138 = vpop.permute.xlu0 %137
    %v140 = vlaneseq
    %v141 = vshrl.u32 %v140, 7
    %v142 = vsub.s32 1, %v141
    %v143 = vrot.slane %v120, %v142
    %v144 = vmul.f32 %v138, %v143
    %v145 = vadd.f32 %v135, %v144
    %146 = vset.pattern.permute.xlu0 2
    %147 = vperm.xlu0 %146, %v18
    %v148 = vpop.permute.xlu0 %147
    %v150 = vlaneseq
    %v151 = vshrl.u32 %v150, 7
    %v152 = vsub.s32 2, %v151
    %v153 = vrot.slane %v120, %v152
    %v154 = vmul.f32 %v148, %v153
    %v155 = vadd.f32 %v145, %v154
    %156 = vset.pattern.permute.xlu0 3
    %157 = vperm.xlu0 %156, %v18
    %v158 = vpop.permute.xlu0 %157
    %v160 = vlaneseq
    %v161 = vshrl.u32 %v160, 7
    %v162 = vsub.s32 3, %v161
    %v163 = vrot.slane %v120, %v162
    %v164 = vmul.f32 %v158, %v163
    %v165 = vadd.f32 %v155, %v164
    %166 = vset.pattern.permute.xlu0 4
    %167 = vperm.xlu0 %166, %v18
    %v168 = vpop.permute.xlu0 %167
    %v170 = vlaneseq
    %v171 = vshrl.u32 %v170, 7
    %v172 = vsub.s32 4, %v171
    %v173 = vrot.slane %v120, %v172
    %v174 = vmul.f32 %v168, %v173
    %v175 = vadd.f32 %v165, %v174
    %176 = vset.pattern.permute.xlu0 5
    %177 = vperm.xlu0 %176, %v18
    %v178 = vpop.permute.xlu0 %177
    %v180 = vlaneseq
    %v181 = vshrl.u32 %v180, 7
    %v182 = vsub.s32 5, %v181
    %v183 = vrot.slane %v120, %v182
    %v184 = vmul.f32 %v178, %v183
    %v185 = vadd.f32 %v175, %v184
    %186 = vset.pattern.permute.xlu0 6
    %187 = vperm.xlu0 %186, %v18
    %v188 = vpop.permute.xlu0 %187
    %v190 = vlaneseq
    %v191 = vshrl.u32 %v190, 7
    %v192 = vsub.s32 6, %v191
    %v193 = vrot.slane %v120, %v192
    %v194 = vmul.f32 %v188, %v193
    %v195 = vadd.f32 %v185, %v194
    %196 = vset.pattern.permute.xlu0 7
    %197 = vperm.xlu0 %196, %v18
    %v198 = vpop.permute.xlu0 %197
    %v200 = vlaneseq
    %v201 = vshrl.u32 %v200, 7
    %v202 = vsub.s32 7, %v201
    %v203 = vrot.slane %v120, %v202
    %v204 = vmul.f32 %v198, %v203
    %v205 = vadd.f32 %v195, %v204
    %206 = vst [vmem:[#allocation2] sm:$0xff] %v120
    %207 = vst [vmem:[#allocation4] sm:$0x7f] %v205
    // Predicated region
    $region10: #{tpu_custom_call.1} parent=1 // pred_check
      _
    $region11: #{tpu_custom_call.1} parent=1 // pred_check_branch
      %209 = sbr.rel (0) target = $region13
    $region12: #{tpu_custom_call.1} parent=1 // pred_region
      %s211 = ssub.s32 128, 128
      %212 = vsyncadd [#allocation3], %s211
      %s214 = sshll.u32 [#allocation2], 4
      %s215 = int_to_ptr.vmem [resolvable:$true] %s214
      %217 = dma.vmem_to_hbm [thread:$0]  %s215, 128, %s2, [#allocation3]
    $region13: #{tpu_custom_call.1} parent=1 // pred_fallthru
      _
    // Predicated region
    $region14: #{tpu_custom_call.1} parent=1 // pred_check
      _
    $region15: #{tpu_custom_call.1} parent=1 // pred_check_branch
      %219 = sbr.rel (0) target = $region17
    $region16: #{tpu_custom_call.1} parent=1 // pred_region
      %s221 = ssub.s32 128, 128
      %222 = vsyncadd [#allocation5], %s221
      %s224 = sshll.u32 [#allocation4], 4
      %s225 = int_to_ptr.vmem [resolvable:$true] %s224
      %227 = dma.vmem_to_hbm [thread:$0]  %s225, 128, %s3, [#allocation5]
    $region17: #{tpu_custom_call.1} parent=1 // pred_fallthru
      _
    // Predicated region
    $region18: #{tpu_custom_call.1} parent=1 // pred_check
      _
    $region19: #{tpu_custom_call.1} parent=1 // pred_check_branch
      %229 = sbr.rel (0) target = $region21
    $region20: #{tpu_custom_call.1} parent=1 // pred_region
      %230 = dma.done [#allocation3], 128
    $region21: #{tpu_custom_call.1} parent=1 // pred_fallthru
      _
    // Predicated region
    $region22: #{tpu_custom_call.1} parent=1 // pred_check
      _
    $region23: #{tpu_custom_call.1} parent=1 // pred_check_branch
      %232 = sbr.rel (0) target = $region25
    $region24: #{tpu_custom_call.1} parent=1 // pred_region
      %233 = dma.done [#allocation5], 128
    $region25: #{tpu_custom_call.1} parent=1 // pred_fallthru
      _
    %234 = vsyncpa [#allocation3], 1
    %235 = vsyncpa [#allocation5], 1

</llo_original>
